<compile_context>
chip_gen: v6e
topology: v6e:2x2x1
jax: 0.10.0
libtpu: 0.0.40
codegen_flags: <defaults>
</compile_context>

<pallas_src>
import functools

import jax
import jax.numpy as jnp
from jax import lax
from jax.experimental import pallas as pl
from jax.experimental.pallas import tpu as pltpu


def _round_up(x, m):
    return ((x + m - 1) // m) * m


def _leaky_relu(x, neg_slope):
    return jnp.where(x >= 0.0, x, neg_slope * x)


def _outer(a, b):
    # (T, 1) x (T, 1) -> (T, T) outer product, no explicit transpose needed.
    return lax.dot_general(a, b, (((1,), (1,)), ((), ())),
                           preferred_element_type=jnp.float32)


def _epilogue(gram, nsq_i, nsq_j, threshold, eps):
    # PyTorch: w12 / sqrt(clamp(w1 * w2, eps^2))  ==  num / max(n1*n2, eps)
    denom_sq = jnp.maximum(_outer(nsq_i, nsq_j), eps * eps)
    cos_abs = jnp.abs(gram) * lax.rsqrt(denom_sq)
    # nn.Threshold(threshold, 0): keep only values strictly greater.
    return jnp.where(cos_abs > threshold, cos_abs, 0.0)


def _single_tile_kernel(z_ref, w_ref, out_ref, *, threshold, eps, neg_slope):
    # z_ref: (1, Np, Dinp)   w_ref: (Dinp, Doutp)   out_ref: (1, Np, Np)
    pre = jnp.dot(z_ref[0], w_ref[...], preferred_element_type=jnp.float32)
    h = _leaky_relu(pre, neg_slope)
    nsq = jnp.sum(h * h, axis=-1, keepdims=True)                        # (Np, 1)
    gram = lax.dot_general(h, h, (((1,), (1,)), ((), ())),
                           preferred_element_type=jnp.float32)           # (Np, Np)
    out_ref[0] = _epilogue(gram, nsq, nsq, threshold, eps).astype(out_ref.dtype)


def _tiled_kernel(zi_ref, zj_ref, w_ref, out_ref, hi_ref, nsqi_ref, *,
                  threshold, eps, neg_slope):
    # zi_ref/zj_ref: (1, TN, Dinp)  w_ref: (Dinp, Doutp)  out_ref: (1, TN, TN)
    # hi_ref: (TN, Doutp) f32 scratch    nsqi_ref: (TN, 1) f32 scratch
    j = pl.program_id(2)

    # Row-tile projection: computed once per (b, i), reused for every j.
    @pl.when(j == 0)
    def _():
        pre_i = jnp.dot(zi_ref[0], w_ref[...], preferred_element_type=jnp.float32)
        hi = _leaky_relu(pre_i, neg_slope)
        hi_ref[...] = hi
        nsqi_ref[...] = jnp.sum(hi * hi, axis=-1, keepdims=True)

    # Column-tile projection (MXU, f32 accumulate).
    pre_j = jnp.dot(zj_ref[0], w_ref[...], preferred_element_type=jnp.float32)
    hj = _leaky_relu(pre_j, neg_slope)
    nsq_j = jnp.sum(hj * hj, axis=-1, keepdims=True)                     # (TN, 1)

    hi = hi_ref[...]
    # gram[p, q] = <hi_p, hj_q>: contract last dims directly (no hj transpose).
    gram = lax.dot_general(hi, hj, (((1,), (1,)), ((), ())),
                           preferred_element_type=jnp.float32)            # (TN, TN)
    out_ref[0] = _epilogue(gram, nsqi_ref[...], nsq_j,
                           threshold, eps).astype(out_ref.dtype)


def learner_head(b_het_z, W, *, threshold=0.1, eps=1e-3, neg_slope=0.01,
                 tile_n=128, out_dtype=jnp.float32):
    """b_het_z: (B, N, Din); W: (Din, Dout) -> adjacency (B, N, N)."""
    B, N, Din = b_het_z.shape
    Din_w, Dout = W.shape
    assert Din == Din_w
    assert tile_n % 128 == 0

    # Zero padding is inert: padded features add 0 to dots / norms; padded rows
    # give gram == 0 and an eps-clamped denom -> cos 0, and are cropped anyway.
    Np = _round_up(N, tile_n)
    Dinp = _round_up(Din, 128)
    Doutp = _round_up(Dout, 128)
    z_p = jnp.pad(b_het_z, ((0, 0), (0, Np - N), (0, Dinp - Din)))
    w_p = jnp.pad(W, ((0, Dinp - Din), (0, Doutp - Dout)))

    n_tiles = Np // tile_n
    in_bytes = jnp.dtype(z_p.dtype).itemsize
    out_bytes = jnp.dtype(out_dtype).itemsize

    if n_tiles == 1:
        kernel = functools.partial(_single_tile_kernel, threshold=threshold,
                                   eps=eps, neg_slope=neg_slope)
        out_p = pl.pallas_call(
            kernel,
            out_shape=jax.ShapeDtypeStruct((B, Np, Np), out_dtype),
            grid=(B,),
            in_specs=[
                pl.BlockSpec((1, Np, Dinp), lambda b: (b, 0, 0)),
                pl.BlockSpec((Dinp, Doutp), lambda b: (0, 0)),
            ],
            out_specs=pl.BlockSpec((1, Np, Np), lambda b: (b, 0, 0)),
            compiler_params=pltpu.CompilerParams(
                dimension_semantics=("parallel",)),
            cost_estimate=pl.CostEstimate(
                flops=int(2 * B * Np * Dinp * Doutp + 2 * B * Np * Np * Doutp
                          + 6 * B * Np * Np),
                transcendentals=int(B * Np * Np),
                bytes_accessed=int(B * Np * Dinp * in_bytes
                                   + Dinp * Doutp * in_bytes
                                   + B * Np * Np * out_bytes)),
        )(z_p, w_p)
    else:
        kernel = functools.partial(_tiled_kernel, threshold=threshold,
                                   eps=eps, neg_slope=neg_slope)
        out_p = pl.pallas_call(
            kernel,
            out_shape=jax.ShapeDtypeStruct((B, Np, Np), out_dtype),
            grid=(B, n_tiles, n_tiles),
            in_specs=[
                pl.BlockSpec((1, tile_n, Dinp), lambda b, i, j: (b, i, 0)),  # rows
                pl.BlockSpec((1, tile_n, Dinp), lambda b, i, j: (b, j, 0)),  # cols
                pl.BlockSpec((Dinp, Doutp), lambda b, i, j: (0, 0)),         # W
            ],
            out_specs=pl.BlockSpec((1, tile_n, tile_n),
                                   lambda b, i, j: (b, i, j)),
            scratch_shapes=[
                pltpu.VMEM((tile_n, Doutp), jnp.float32),   # cached row-tile h
                pltpu.VMEM((tile_n, 1), jnp.float32),       # cached row |h|^2
            ],
            compiler_params=pltpu.CompilerParams(
                dimension_semantics=("parallel", "parallel", "arbitrary")),
            cost_estimate=pl.CostEstimate(
                flops=int(2 * B * Np * Dinp * Doutp * (1 + n_tiles)
                          + 2 * B * Np * Np * Doutp + 6 * B * Np * Np),
                transcendentals=int(B * Np * Np),
                bytes_accessed=int(B * Np * Dinp * in_bytes * (1 + n_tiles)
                                   + Dinp * Doutp * in_bytes
                                   + B * Np * Np * out_bytes)),
        )(z_p, z_p, w_p)

    return out_p[:, :N, :N]


def xavier_uniform(key, shape, gain):
    fan_in, fan_out = shape
    bound = gain * jnp.sqrt(6.0 / (fan_in + fan_out))
    return jax.random.uniform(key, shape, jnp.float32, minval=-bound, maxval=bound)


def reference_learner_head(b_het_z, W, threshold=0.1, eps=1e-3, neg_slope=0.01):
    h = b_het_z @ W
    h = jnp.where(h >= 0.0, h, neg_slope * h)
    num = jnp.einsum("bid,bjd->bij", h, h)
    norm = jnp.sqrt(jnp.sum(h * h, axis=-1))
    denom = jnp.maximum(norm[:, :, None] * norm[:, None, :], eps)
    cos = jnp.abs(num / denom)
    return cos, jnp.where(cos > threshold, cos, 0.0)


def _check(adj, b_het_z, W, threshold):
    cos_ref, adj_ref = reference_learner_head(b_het_z, W, threshold=threshold)
    assert adj.shape == adj_ref.shape, (adj.shape, adj_ref.shape)
    diff = jnp.abs(adj - adj_ref)
    # Exempt entries sitting right on the 0.1 threshold, where an infinitesimal
    # fp difference legally flips 0 <-> x.
    near_thr = jnp.abs(cos_ref - threshold) < 1e-3
    assert bool(jnp.all((diff <= 1e-3) | near_thr)), float(jnp.max(diff))


if __name__ == "__main__":
    key = jax.random.PRNGKey(0)
    k_w, k_z1, k_z2 = jax.random.split(key, 3)

    threshold = 0.1
    B, n_in_feats, n_out_feats = 2, 32, 16
    W = xavier_uniform(k_w, (n_in_feats, n_out_feats), gain=1.414)

    # Case 1: small graph (N=8) -> single-tile fast path.
    N1 = 8
    z1 = jax.random.normal(k_z1, (B, N1, n_in_feats), dtype=jnp.float32)
    adj1 = jax.block_until_ready(learner_head(z1, W, threshold=threshold))
    _check(adj1, z1, W, threshold)

    # Case 2: larger graph (N=200) -> tiled path (2x2 output tiles per batch).
    N2 = 200
    z2 = jax.random.normal(k_z2, (B, N2, n_in_feats), dtype=jnp.float32)
    adj2 = jax.block_until_ready(learner_head(z2, W, threshold=threshold))
    _check(adj2, z2, W, threshold)

    print("KERNEL_OK")
</pallas_src>

<mosaic_0001>
module attributes {stable_mosaic.version = 11 : i64} {
  func.func @_single_tile_kernel(%arg0: i32, %arg1: memref<1x128x128xf32, #tpu.memory_space<vmem>>, %arg2: memref<128x128xf32, #tpu.memory_space<vmem>>, %arg3: memref<1x128x128xf32, #tpu.memory_space<vmem>>) attributes {dimension_semantics = [#tpu.dimension_semantics<parallel>], iteration_bounds = array<i64: 2>, scalar_prefetch = 0 : i64, scratch_operands = 0 : i64, tpu.core_type = #tpu.core_type<tc>, window_params = [{transform_indices = @transform_0, window_bounds = array<i64: 1, 128, 128>}, {pipeline_mode = #tpu.pipeline_mode<synchronous>, transform_indices = @transform_1, window_bounds = array<i64: 128, 128>}, {transform_indices = @transform_2, window_bounds = array<i64: 1, 128, 128>}]} {
    %c0 = arith.constant 0 : index
    %c0_0 = arith.constant 0 : index
    %c0_1 = arith.constant 0 : index
    %0 = vector.load %arg1[%c0, %c0_0, %c0_1] : memref<1x128x128xf32, #tpu.memory_space<vmem>>, vector<1x128x128xf32>
    %1 = vector.shape_cast %0 : vector<1x128x128xf32> to vector<128x128xf32>
    %c0_2 = arith.constant 0 : index
    %c0_3 = arith.constant 0 : index
    %2 = vector.load %arg2[%c0_2, %c0_3] : memref<128x128xf32, #tpu.memory_space<vmem>>, vector<128x128xf32>
    %cst = arith.constant dense<0.000000e+00> : vector<128x128xf32>
    %3 = tpu.matmul %1, %2, %cst {dimension_numbers = #tpu.dot_dimension_numbers<[1], [0], [0], [1], [0, 0, 1, 1], [], []>} : vector<128x128xf32>, vector<128x128xf32>, vector<128x128xf32> -> vector<128x128xf32>
    %cst_4 = arith.constant 0.000000e+00 : f32
    %4 = vector.broadcast %cst_4 : f32 to vector<128x128xf32>
    %5 = arith.cmpf oge, %3, %4 : vector<128x128xf32>
    %cst_5 = arith.constant 0.00999999977 : f32
    %6 = vector.broadcast %cst_5 : f32 to vector<128x128xf32>
    %7 = arith.mulf %6, %3 : vector<128x128xf32>
    %8 = arith.select %5, %3, %7 : vector<128x128xi1>, vector<128x128xf32>
    %9 = arith.mulf %8, %8 : vector<128x128xf32>
    %cst_6 = arith.constant dense<0.000000e+00> : vector<128xf32>
    %10 = vector.multi_reduction <add>, %9, %cst_6 [1] : vector<128x128xf32> to vector<128xf32>
    %11 = vector.shape_cast %10 : vector<128xf32> to vector<128x1xf32>
    %cst_7 = arith.constant dense<0.000000e+00> : vector<128x128xf32>
    %12 = tpu.matmul %8, %8, %cst_7 {dimension_numbers = #tpu.dot_dimension_numbers<[1], [1], [0], [0], [0, 0, 1, 0], [], []>} : vector<128x128xf32>, vector<128x128xf32>, vector<128x128xf32> -> vector<128x128xf32>
    %cst_8 = arith.constant dense<0.000000e+00> : vector<128x128xf32>
    %13 = tpu.matmul %11, %11, %cst_8 {dimension_numbers = #tpu.dot_dimension_numbers<[1], [1], [0], [0], [0, 0, 1, 0], [], []>} : vector<128x1xf32>, vector<128x1xf32>, vector<128x128xf32> -> vector<128x128xf32>
    %cst_9 = arith.constant 9.99999997E-7 : f32
    %14 = vector.broadcast %cst_9 : f32 to vector<128x128xf32>
    %15 = arith.maximumf %13, %14 : vector<128x128xf32>
    %16 = math.absf %12 : vector<128x128xf32>
    %17 = math.rsqrt %15 : vector<128x128xf32>
    %18 = arith.mulf %16, %17 : vector<128x128xf32>
    %cst_10 = arith.constant 1.000000e-01 : f32
    %19 = vector.broadcast %cst_10 : f32 to vector<128x128xf32>
    %20 = arith.cmpf ogt, %18, %19 : vector<128x128xf32>
    %cst_11 = arith.constant 0.000000e+00 : f32
    %21 = vector.broadcast %cst_11 : f32 to vector<128x128xf32>
    %22 = arith.select %20, %18, %21 : vector<128x128xi1>, vector<128x128xf32>
    %c0_12 = arith.constant 0 : index
    %c0_13 = arith.constant 0 : index
    %c0_14 = arith.constant 0 : index
    %23 = vector.load %arg3[%c0_12, %c0_13, %c0_14] : memref<1x128x128xf32, #tpu.memory_space<vmem>>, vector<1x128x128xf32>
    %24 = vector.shape_cast %23 : vector<1x128x128xf32> to vector<128x128xf32>
    %25 = vector.shape_cast %22 : vector<128x128xf32> to vector<1x128x128xf32>
    tpu.vector_store %arg3[%c0_12, %c0_13, %c0_14], %25 {strides = array<i32>} : memref<1x128x128xf32, #tpu.memory_space<vmem>>, vector<1x128x128xf32>,
    return
  }
  func.func @transform_0(%arg0: i32) -> (i32, i32, i32) {
    %c0_i32 = arith.constant 0 : i32
    %c0_i32_0 = arith.constant 0 : i32
    %c0_i32_1 = arith.constant 0 : i32
    return %arg0, %c0_i32, %c0_i32_0 : i32, i32, i32
  }
  func.func @transform_1(%arg0: i32) -> (i32, i32) {
    %c0_i32 = arith.constant 0 : i32
    %c0_i32_0 = arith.constant 0 : i32
    %c0_i32_1 = arith.constant 0 : i32
    return %c0_i32, %c0_i32_0 : i32, i32
  }
  func.func @transform_2(%arg0: i32) -> (i32, i32, i32) {
    %c0_i32 = arith.constant 0 : i32
    %c0_i32_0 = arith.constant 0 : i32
    %c0_i32_1 = arith.constant 0 : i32
    return %arg0, %c0_i32, %c0_i32_0 : i32, i32, i32
  }
}

</mosaic_0001>

<llo_original>
// kernel: tpu_custom_call.1
$region0: #{tpu_custom_call.1}
  #allocation0 [shape = 'u32[]', space=smem, size = 0x4, offset = 0x4, fixed_abs, tag = 'smem constant byte address 0x4 - core index']
  #allocation1 [shape = 'u32[144,128]{1,0:T(1,128)}', space=vmem, size = 0x12000, scoped, tag = 'internal scratch']
  %s0 = inlined_call_operand.hbm [shape: f32[2,128,128], index: 0, kind: input, shape index: {}]
  %s1 = inlined_call_operand.hbm [shape: f32[128,128], index: 1, kind: input, shape index: {}]
  %s2 = inlined_call_operand.hbm [shape: f32[2,128,128], index: 2, kind: output, shape index: {}]
  %s3 = sld [smem:[#allocation0]]
  $region49: #{tpu_custom_call.1} parent=0
    _
  %s5 = ssub.s32 1, %s3
  %s6 = scalar_select 0, %s5, %s3
  $region1: #{tpu_custom_call.1} parent=0
    #allocation2 [shape = 'u8[131072]{0}', space=vmem, size = 0x20000, scoped, tag = 'input window, operand 0']
    #allocation3 [shape = 's32[2]{0}', space=sflag, size = 0x8, scoped, tag = 'scoped memory for tpu_custom_call.1']
    #allocation4 [shape = 's32[2]{0}', space=sflag, size = 0x8, scoped, tag = 'scoped memory for tpu_custom_call.1']
    #allocation5 [shape = 'u8[65536]{0}', space=vmem, size = 0x10000, scoped, tag = 'input window, operand 1, single buffered']
    #allocation6 [shape = 's32[1]{0}', space=sflag, size = 0x4, scoped, tag = 'scoped memory for tpu_custom_call.1']
    #allocation7 [shape = 'u8[131072]{0}', space=vmem, size = 0x20000, scoped, tag = 'output window, operand 0']
    %7 = vsyncpa [#allocation3], 0
    %s8 = scalar_lea.sflag [#allocation3], 1
    %9 = vsyncpa %s8, 0
    %10 = vsyncpa [#allocation6], 0
    %11 = vsyncpa [#allocation4], 0
    %s12 = scalar_lea.sflag [#allocation4], 1
    %13 = vsyncpa %s12, 0
    loop: start=0, step=1, limit=4
    $region2: #{tpu_custom_call.1} parent=1 // loop_pre_header
      _
    $region3: #{tpu_custom_call.1} parent=1 // loop_header
      %s15 = sphi 0, %s19
      %p16 = scmp.ge.s32.totalorder %s15, 4
      %s25 = sphi 0, %s27
      %s28 = sphi 0, %s25
      %s29 = sphi 0, %s28
      %s45 = sphi 0, %s29
      %s49 = sphi 0, %s49
      %s51 = sphi 0, %s49
      %s52 = sphi 0, %s51
      %s66 = sphi 0, %s52
      %s72 = sphi 0, %s74
      %s75 = sphi 0, %s72
      %s76 = sphi 0, %s75
      %s92 = sphi 0, %s76
    $region4: #{tpu_custom_call.1} parent=1 // loop_header_branch
      %18 = sbr.rel (%p16) target = $region8
    $region5: #{tpu_custom_call.1} parent=1 // loop_body
      %s20 = ssub.s32 %s15, 1
      %s21 = ssub.s32 %s15, 2
      %s22 = sadd.s32 %s15, 1
      %s23 = ssub.s32 %s15, %s22
      %p24 = scmp.eq.s32.totalorder %s23, 0
      %s26 = sadd.s32 %s25, 1
      %s27 = scalar_select %p24, %s25, %s26
      %p30 = pneg %p24
      %p31 = scmp.eq.s32.totalorder %s15, 1
      %p32 = por %p30, %p31
      %p33 = scmp.ne.s32.totalorder %s25, %s28
      %p34 = scmp.eq.s32.totalorder %s15, 0
      %p35 = por %p33, %p34
      %p36 = scmp.ne.s32.totalorder %s25, %s28
      %p37 = scmp.eq.s32.totalorder %s20, 1
      %p38 = por %p36, %p37
      %p39 = scmp.ne.s32.totalorder %s28, %s29
      %p40 = scmp.eq.s32.totalorder %s20, 0
      %p41 = por %p39, %p40
      %p42 = scmp.ne.s32.totalorder %s28, %s29
      %p43 = scmp.eq.s32.totalorder %s21, 1
      %p44 = por %p42, %p43
      %p46 = scmp.ne.s32.totalorder %s29, %s45
      %p47 = scmp.eq.s32.totalorder %s21, 0
      %p48 = por %p46, %p47
      %s50 = sadd.s32 %s49, 1
      %p53 = scmp.eq.s32.totalorder %s15, 1
      %p54 = scmp.ne.s32.totalorder %s49, %s51
      %p55 = scmp.eq.s32.totalorder %s15, 0
      %p56 = por %p54, %p55
      %p57 = scmp.ne.s32.totalorder %s49, %s51
      %p58 = scmp.eq.s32.totalorder %s20, 1
      %p59 = por %p57, %p58
      %p60 = scmp.ne.s32.totalorder %s51, %s52
      %p61 = scmp.eq.s32.totalorder %s20, 0
      %p62 = por %p60, %p61
      %p63 = scmp.ne.s32.totalorder %s51, %s52
      %p64 = scmp.eq.s32.totalorder %s21, 1
      %p65 = por %p63, %p64
      %p67 = scmp.ne.s32.totalorder %s52, %s66
      %p68 = scmp.eq.s32.totalorder %s21, 0
      %p69 = por %p67, %p68
      %s70 = ssub.s32 %s15, %s22
      %p71 = scmp.eq.s32.totalorder %s70, 0
      %s73 = sadd.s32 %s72, 1
      %s74 = scalar_select %p71, %s72, %s73
      %p77 = pneg %p71
      %p78 = scmp.eq.s32.totalorder %s15, 1
      %p79 = por %p77, %p78
      %p80 = scmp.ne.s32.totalorder %s72, %s75
      %p81 = scmp.eq.s32.totalorder %s15, 0
      %p82 = por %p80, %p81
      %p83 = scmp.ne.s32.totalorder %s72, %s75
      %p84 = scmp.eq.s32.totalorder %s20, 1
      %p85 = por %p83, %p84
      %p86 = scmp.ne.s32.totalorder %s75, %s76
      %p87 = scmp.eq.s32.totalorder %s20, 0
      %p88 = por %p86, %p87
      %p89 = scmp.ne.s32.totalorder %s75, %s76
      %p90 = scmp.eq.s32.totalorder %s21, 1
      %p91 = por %p89, %p90
      %p93 = scmp.ne.s32.totalorder %s76, %s92
      %p94 = scmp.eq.s32.totalorder %s21, 0
      %p95 = por %p93, %p94
      %p96 = scmp.le.s32.totalorder 1, %s15
      %p97 = scmp.lt.s32.totalorder %s15, 3
      %p98 = pnand %p96, %p97
      %p99 = pneg %p98
      // Predicated region
      $region9: #{tpu_custom_call.1} parent=5 // pred_check
        _
      $region10: #{tpu_custom_call.1} parent=5 // pred_check_branch
        %101 = sbr.rel (%p98) target = $region12
      $region11: #{tpu_custom_call.1} parent=5 // pred_region
        %s102 = ssub.s32 %s15, 1
        // Predicated region
        $region13: #{tpu_custom_call.1} parent=11 // pred_check
          %p103 = pneg %p62
        $region14: #{tpu_custom_call.1} parent=11 // pred_check_branch
          %105 = sbr.rel (%p103) target = $region16
        $region15: #{tpu_custom_call.1} parent=11 // pred_region
          %s107 = ssub.s32 2048, 2048
          %108 = vsyncadd [#allocation6], %s107
          %s109 = sshll.u32 [#allocation5], 4
          %s110 = int_to_ptr.vmem [resolvable:$true] %s109
          %115 = dma.hbm_to_vmem [thread:$0]  %s1, 2048, %s110, [#allocation6], 128, 128, 8
        $region16: #{tpu_custom_call.1} parent=11 // pred_fallthru
          _
      $region12: #{tpu_custom_call.1} parent=5 // pred_fallthru
        _
      %p116 = scmp.lt.s32.totalorder %s15, 2
      // Predicated region
      $region17: #{tpu_custom_call.1} parent=5 // pred_check
        %p117 = pneg %p116
      $region18: #{tpu_custom_call.1} parent=5 // pred_check_branch
        %119 = sbr.rel (%p117) target = $region20
      $region19: #{tpu_custom_call.1} parent=5 // pred_region
        // Predicated region
        $region21: #{tpu_custom_call.1} parent=19 // pred_check
          %p120 = pneg %p35
        $region22: #{tpu_custom_call.1} parent=19 // pred_check_branch
          %122 = sbr.rel (%p120) target = $region24
        $region23: #{tpu_custom_call.1} parent=19 // pred_region
          %s123 = sand.u32 %s25, 1
          %s124 = scalar_lea.sflag [#allocation3], %s123
          %s125 = sand.u32 %s25, 1
          %s126 = smul.addr %s125, 128
          %s127 = scalar_lea.vmem [#allocation2], %s126
          %s129 = ssub.s32 2048, 2048
          %130 = vsyncadd %s124, %s129
          %s131 = smul.addr %s15, 16
          %s132 = smul.addr %s131, 128
          %s133 = scalar_lea.hbm %s0, %s132
          %s134 = sshll.u32 %s127, 4
          %s135 = int_to_ptr.vmem [resolvable:$true] %s134
          %140 = dma.hbm_to_vmem [thread:$0]  %s133, 2048, %s135, %s124, 128, 128, 8
        $region24: #{tpu_custom_call.1} parent=19 // pred_fallthru
          _
      $region20: #{tpu_custom_call.1} parent=5 // pred_fallthru
        _
      %p141 = scmp.le.s32.totalorder 1, %s15
      %p142 = scmp.lt.s32.totalorder %s15, 3
      %p143 = pnand %p141, %p142
      %p144 = pneg %p143
      // Predicated region
      $region25: #{tpu_custom_call.1} parent=5 // pred_check
        _
      $region26: #{tpu_custom_call.1} parent=5 // pred_check_branch
        %146 = sbr.rel (%p143) target = $region28
      $region27: #{tpu_custom_call.1} parent=5 // pred_region
        %s147 = ssub.s32 %s15, 1
        %s148 = sand.u32 %s28, 1
        %s149 = scalar_lea.sflag [#allocation3], %s148
        %s150 = sand.u32 %s28, 1
        %s151 = smul.addr %s150, 128
        %s152 = scalar_lea.vmem [#allocation2], %s151
        // Predicated region
        $region29: #{tpu_custom_call.1} parent=27 // pred_check
          %p153 = pneg %p41
        $region30: #{tpu_custom_call.1} parent=27 // pred_check_branch
          %155 = sbr.rel (%p153) target = $region32
        $region31: #{tpu_custom_call.1} parent=27 // pred_region
          %156 = dma.done %s149, 2048
        $region32: #{tpu_custom_call.1} parent=27 // pred_fallthru
          _
        // Predicated region
        $region33: #{tpu_custom_call.1} parent=27 // pred_check
          %p157 = pneg %p62
        $region34: #{tpu_custom_call.1} parent=27 // pred_check_branch
          %159 = sbr.rel (%p157) target = $region36
        $region35: #{tpu_custom_call.1} parent=27 // pred_region
          %160 = dma.done [#allocation6], 2048
        $region36: #{tpu_custom_call.1} parent=27 // pred_fallthru
          _
        %s161 = sand.u32 %s28, 1
        %s162 = scalar_lea.sflag [#allocation3], %s161
        %s163 = sand.u32 %s28, 1
        %s164 = smul.addr %s163, 128
        %s165 = scalar_lea.vmem [#allocation2], %s164
        %p166 = pneg %p41
        %p167 = pneg %p38
        %p168 = pneg %p62
        %p169 = pneg %p59
        %p170 = pneg %p88
        %p171 = pneg %p85
        %s172 = sand.u32 %s75, 1
        %s173 = scalar_lea.sflag [#allocation4], %s172
        %s174 = sand.u32 %s75, 1
        %s175 = smul.addr %s174, 128
        %s176 = scalar_lea.vmem [#allocation7], %s175
        %v177 = vld [vmem:[%s152] sm:$0xff]
        %v178 = vld [vmem:[%s152 + $0x8] sm:$0xff]
        %v179 = vld [vmem:[%s152 + $0x10] sm:$0xff]
        %v180 = vld [vmem:[%s152 + $0x18] sm:$0xff]
        %v181 = vld [vmem:[%s152 + $0x20] sm:$0xff]
        %v182 = vld [vmem:[%s152 + $0x28] sm:$0xff]
        %v183 = vld [vmem:[%s152 + $0x30] sm:$0xff]
        %v184 = vld [vmem:[%s152 + $0x38] sm:$0xff]
        %v185 = vld [vmem:[%s152 + $0x40] sm:$0xff]
        %v186 = vld [vmem:[%s152 + $0x48] sm:$0xff]
        %v187 = vld [vmem:[%s152 + $0x50] sm:$0xff]
        %v188 = vld [vmem:[%s152 + $0x58] sm:$0xff]
        %v189 = vld [vmem:[%s152 + $0x60] sm:$0xff]
        %v190 = vld [vmem:[%s152 + $0x68] sm:$0xff]
        %v191 = vld [vmem:[%s152 + $0x70] sm:$0xff]
        %v192 = vld [vmem:[%s152 + $0x78] sm:$0xff]
        %v193 = vld [vmem:[#allocation5] sm:$0xff]
        %v194 = vld [vmem:[#allocation5 + $0x8] sm:$0xff]
        %v195 = vld [vmem:[#allocation5 + $0x10] sm:$0xff]
        %v196 = vld [vmem:[#allocation5 + $0x18] sm:$0xff]
        %v197 = vld [vmem:[#allocation5 + $0x20] sm:$0xff]
        %v198 = vld [vmem:[#allocation5 + $0x28] sm:$0xff]
        %v199 = vld [vmem:[#allocation5 + $0x30] sm:$0xff]
        %v200 = vld [vmem:[#allocation5 + $0x38] sm:$0xff]
        %v201 = vld [vmem:[#allocation5 + $0x40] sm:$0xff]
        %v202 = vld [vmem:[#allocation5 + $0x48] sm:$0xff]
        %v203 = vld [vmem:[#allocation5 + $0x50] sm:$0xff]
        %v204 = vld [vmem:[#allocation5 + $0x58] sm:$0xff]
        %v205 = vld [vmem:[#allocation5 + $0x60] sm:$0xff]
        %v206 = vld [vmem:[#allocation5 + $0x68] sm:$0xff]
        %v207 = vld [vmem:[#allocation5 + $0x70] sm:$0xff]
        %v208 = vld [vmem:[#allocation5 + $0x78] sm:$0xff]
        %209 = vmatprep.subr.mxu0 0.0
        %210 = vmatpush1.msra.mxu0 %v208
        %211 = vmatprep.subr.mxu0 0.0
        %212 = vmatpush1.msra.mxu0 %v207
        %213 = vmatprep.subr.mxu0 0.0
        %214 = vmatpush1.msra.mxu0 %v206
        %215 = vmatprep.subr.mxu0 0.0
        %216 = vmatpush1.msra.mxu0 %v205
        %217 = vmatprep.subr.mxu0 0.0
        %218 = vmatpush1.msra.mxu0 %v204
        %219 = vmatprep.subr.mxu0 0.0
        %220 = vmatpush1.msra.mxu0 %v203
        %221 = vmatprep.subr.mxu0 0.0
        %222 = vmatpush1.msra.mxu0 %v202
        %223 = vmatprep.subr.mxu0 0.0
        %224 = vmatpush1.msra.mxu0 %v201
        %225 = vmatprep.subr.mxu0 0.0
        %226 = vmatpush1.msra.mxu0 %v200
        %227 = vmatprep.subr.mxu0 0.0
        %228 = vmatpush1.msra.mxu0 %v199
        %229 = vmatprep.subr.mxu0 0.0
        %230 = vmatpush1.msra.mxu0 %v198
        %231 = vmatprep.subr.mxu0 0.0
        %232 = vmatpush1.msra.mxu0 %v197
        %233 = vmatprep.subr.mxu0 0.0
        %234 = vmatpush1.msra.mxu0 %v196
        %235 = vmatprep.subr.mxu0 0.0
        %236 = vmatpush1.msra.mxu0 %v195
        %237 = vmatprep.subr.mxu0 0.0
        %238 = vmatpush1.msra.mxu0 %v194
        %239 = vmatprep.subr.mxu0 0.0
        %240 = vmatpush1.msra.mxu0 %v193
        %241 = vmatprep.subr.mxu0 0.0
        %242 = vmatpush2.msra.mxu0 0.0
        %243 = vmatprep.subr.mxu0 0.0
        %244 = vmatpush2.msra.mxu0 0.0
        %245 = vmatprep.subr.mxu0 0.0
        %246 = vmatpush2.msra.mxu0 0.0
        %247 = vmatprep.subr.mxu0 0.0
        %248 = vmatpush2.msra.mxu0 0.0
        %249 = vmatprep.subr.mxu0 0.0
        %250 = vmatpush2.msra.mxu0 0.0
        %251 = vmatprep.subr.mxu0 0.0
        %252 = vmatpush2.msra.mxu0 0.0
        %253 = vmatprep.subr.mxu0 0.0
        %254 = vmatpush2.msra.mxu0 0.0
        %255 = vmatprep.subr.mxu0 0.0
        %256 = vmatpush2.msra.mxu0 0.0
        %257 = vmatprep.subr.mxu0 0.0
        %258 = vmatpush2.msra.mxu0 0.0
        %259 = vmatprep.subr.mxu0 0.0
        %260 = vmatpush2.msra.mxu0 0.0
        %261 = vmatprep.subr.mxu0 0.0
        %262 = vmatpush2.msra.mxu0 0.0
        %263 = vmatprep.subr.mxu0 0.0
        %264 = vmatpush2.msra.mxu0 0.0
        %265 = vmatprep.subr.mxu0 0.0
        %266 = vmatpush2.msra.mxu0 0.0
        %267 = vmatprep.subr.mxu0 0.0
        %268 = vmatpush2.msra.mxu0 0.0
        %269 = vmatprep.subr.mxu0 0.0
        %270 = vmatpush2.msra.mxu0 0.0
        %271 = vmatprep.subr.mxu0 0.0
        %272 = vmatpush2.msra.mxu0 0.0
        %273 = vmatprep.mubr.f32.mxu0 0.0
        %274 = vmatmul.mubr.f32.gmra.mxu0 %v177
        %v275 = vpop.f32.mrf.mxu0
        %v276 = vadd.f32 0.0, %v275
        %v277 = vpop.f32.mrf.mxu0
        %278 = vmatprep.mubr.f32.mxu0 0.0
        %279 = vmatmul.mubr.f32.gmra.mxu0 %v178
        %v280 = vpop.f32.mrf.mxu0
        %v281 = vadd.f32 0.0, %v280
        %v282 = vpop.f32.mrf.mxu0
        %283 = vmatprep.mubr.f32.mxu0 0.0
        %284 = vmatmul.mubr.f32.gmra.mxu0 %v179
        %v285 = vpop.f32.mrf.mxu0
        %v286 = vadd.f32 0.0, %v285
        %v287 = vpop.f32.mrf.mxu0
        %288 = vmatprep.mubr.f32.mxu0 0.0
        %289 = vmatmul.mubr.f32.gmra.mxu0 %v180
        %v290 = vpop.f32.mrf.mxu0
        %v291 = vadd.f32 0.0, %v290
        %v292 = vpop.f32.mrf.mxu0
        %293 = vmatprep.mubr.f32.mxu0 0.0
        %294 = vmatmul.mubr.f32.gmra.mxu0 %v181
        %v295 = vpop.f32.mrf.mxu0
        %v296 = vadd.f32 0.0, %v295
        %v297 = vpop.f32.mrf.mxu0
        %298 = vmatprep.mubr.f32.mxu0 0.0
        %299 = vmatmul.mubr.f32.gmra.mxu0 %v182
        %v300 = vpop.f32.mrf.mxu0
        %v301 = vadd.f32 0.0, %v300
        %v302 = vpop.f32.mrf.mxu0
        %303 = vmatprep.mubr.f32.mxu0 0.0
        %304 = vmatmul.mubr.f32.gmra.mxu0 %v183
        %v305 = vpop.f32.mrf.mxu0
        %v306 = vadd.f32 0.0, %v305
        %v307 = vpop.f32.mrf.mxu0
        %308 = vmatprep.mubr.f32.mxu0 0.0
        %309 = vmatmul.mubr.f32.gmra.mxu0 %v184
        %v310 = vpop.f32.mrf.mxu0
        %v311 = vadd.f32 0.0, %v310
        %v312 = vpop.f32.mrf.mxu0
        %313 = vmatprep.mubr.f32.mxu0 0.0
        %314 = vmatmul.mubr.f32.gmra.mxu0 %v185
        %v315 = vpop.f32.mrf.mxu0
        %v316 = vadd.f32 0.0, %v315
        %v317 = vpop.f32.mrf.mxu0
        %318 = vmatprep.mubr.f32.mxu0 0.0
        %319 = vmatmul.mubr.f32.gmra.mxu0 %v186
        %v320 = vpop.f32.mrf.mxu0
        %v321 = vadd.f32 0.0, %v320
        %v322 = vpop.f32.mrf.mxu0
        %323 = vmatprep.mubr.f32.mxu0 0.0
        %324 = vmatmul.mubr.f32.gmra.mxu0 %v187
        %v325 = vpop.f32.mrf.mxu0
        %v326 = vadd.f32 0.0, %v325
        %v327 = vpop.f32.mrf.mxu0
        %328 = vmatprep.mubr.f32.mxu0 0.0
        %329 = vmatmul.mubr.f32.gmra.mxu0 %v188
        %v330 = vpop.f32.mrf.mxu0
        %v331 = vadd.f32 0.0, %v330
        %v332 = vpop.f32.mrf.mxu0
        %333 = vmatprep.mubr.f32.mxu0 0.0
        %334 = vmatmul.mubr.f32.gmra.mxu0 %v189
        %v335 = vpop.f32.mrf.mxu0
        %v336 = vadd.f32 0.0, %v335
        %v337 = vpop.f32.mrf.mxu0
        %338 = vmatprep.mubr.f32.mxu0 0.0
        %339 = vmatmul.mubr.f32.gmra.mxu0 %v190
        %v340 = vpop.f32.mrf.mxu0
        %v341 = vadd.f32 0.0, %v340
        %v342 = vpop.f32.mrf.mxu0
        %343 = vmatprep.mubr.f32.mxu0 0.0
        %344 = vmatmul.mubr.f32.gmra.mxu0 %v191
        %v345 = vpop.f32.mrf.mxu0
        %v346 = vadd.f32 0.0, %v345
        %v347 = vpop.f32.mrf.mxu0
        %348 = vmatprep.mubr.f32.mxu0 0.0
        %349 = vmatmul.mubr.f32.gmra.mxu0 %v192
        %v350 = vpop.f32.mrf.mxu0
        %v351 = vadd.f32 0.0, %v350
        %v352 = vpop.f32.mrf.mxu0
        %353 = vdwg.mxu0
        %vm354 = vcmp.ge.f32.partialorder %v276, 0.0
        %vm355 = vcmp.ge.f32.partialorder %v281, 0.0
        %vm356 = vcmp.ge.f32.partialorder %v286, 0.0
        %vm357 = vcmp.ge.f32.partialorder %v291, 0.0
        %vm358 = vcmp.ge.f32.partialorder %v296, 0.0
        %vm359 = vcmp.ge.f32.partialorder %v301, 0.0
        %vm360 = vcmp.ge.f32.partialorder %v306, 0.0
        %vm361 = vcmp.ge.f32.partialorder %v311, 0.0
        %vm362 = vcmp.ge.f32.partialorder %v316, 0.0
        %vm363 = vcmp.ge.f32.partialorder %v321, 0.0
        %vm364 = vcmp.ge.f32.partialorder %v326, 0.0
        %vm365 = vcmp.ge.f32.partialorder %v331, 0.0
        %vm366 = vcmp.ge.f32.partialorder %v336, 0.0
        %vm367 = vcmp.ge.f32.partialorder %v341, 0.0
        %vm368 = vcmp.ge.f32.partialorder %v346, 0.0
        %vm369 = vcmp.ge.f32.partialorder %v351, 0.0
        %v370 = vmul.f32 %v276, 0.01
        %v371 = vmul.f32 %v281, 0.01
        %v372 = vmul.f32 %v286, 0.01
        %v373 = vmul.f32 %v291, 0.01
        %v374 = vmul.f32 %v296, 0.01
        %v375 = vmul.f32 %v301, 0.01
        %v376 = vmul.f32 %v306, 0.01
        %v377 = vmul.f32 %v311, 0.01
        %v378 = vmul.f32 %v316, 0.01
        %v379 = vmul.f32 %v321, 0.01
        %v380 = vmul.f32 %v326, 0.01
        %v381 = vmul.f32 %v331, 0.01
        %v382 = vmul.f32 %v336, 0.01
        %v383 = vmul.f32 %v341, 0.01
        %v384 = vmul.f32 %v346, 0.01
        %v385 = vmul.f32 %v351, 0.01
        %v386 = vsel %vm354, %v276, %v370
        %v387 = vsel %vm355, %v281, %v371
        %v388 = vsel %vm356, %v286, %v372
        %v389 = vsel %vm357, %v291, %v373
        %v390 = vsel %vm358, %v296, %v374
        %v391 = vsel %vm359, %v301, %v375
        %v392 = vsel %vm360, %v306, %v376
        %v393 = vsel %vm361, %v311, %v377
        %v394 = vsel %vm362, %v316, %v378
        %v395 = vsel %vm363, %v321, %v379
        %v396 = vsel %vm364, %v326, %v380
        %v397 = vsel %vm365, %v331, %v381
        %v398 = vsel %vm366, %v336, %v382
        %v399 = vsel %vm367, %v341, %v383
        %v400 = vsel %vm368, %v346, %v384
        %v401 = vsel %vm369, %v351, %v385
        %v402 = vmul.f32 %v386, %v386
        %v403 = vmul.f32 %v387, %v387
        %v404 = vmul.f32 %v388, %v388
        %v405 = vmul.f32 %v389, %v389
        %v406 = vmul.f32 %v390, %v390
        %v407 = vmul.f32 %v391, %v391
        %v408 = vmul.f32 %v392, %v392
        %v409 = vmul.f32 %v393, %v393
        %v410 = vmul.f32 %v394, %v394
        %v411 = vmul.f32 %v395, %v395
        %v412 = vmul.f32 %v396, %v396
        %v413 = vmul.f32 %v397, %v397
        %v414 = vmul.f32 %v398, %v398
        %v415 = vmul.f32 %v399, %v399
        %v416 = vmul.f32 %v400, %v400
        %v417 = vmul.f32 %v401, %v401
        %418 = vadd.xlane.f32.xlu0 %v402
        %v419 = vpop.xlane.xlu0 %418
        %420 = vadd.xlane.f32.xlu0 %v403
        %v421 = vpop.xlane.xlu0 %420
        %422 = vadd.xlane.f32.xlu0 %v404
        %v423 = vpop.xlane.xlu0 %422
        %424 = vadd.xlane.f32.xlu0 %v405
        %v425 = vpop.xlane.xlu0 %424
        %426 = vadd.xlane.f32.xlu0 %v406
        %v427 = vpop.xlane.xlu0 %426
        %428 = vadd.xlane.f32.xlu0 %v407
        %v429 = vpop.xlane.xlu0 %428
        %430 = vadd.xlane.f32.xlu0 %v408
        %v431 = vpop.xlane.xlu0 %430
        %432 = vadd.xlane.f32.xlu0 %v409
        %v433 = vpop.xlane.xlu0 %432
        %434 = vadd.xlane.f32.xlu0 %v410
        %v435 = vpop.xlane.xlu0 %434
        %436 = vadd.xlane.f32.xlu0 %v411
        %v437 = vpop.xlane.xlu0 %436
        %438 = vadd.xlane.f32.xlu0 %v412
        %v439 = vpop.xlane.xlu0 %438
        %440 = vadd.xlane.f32.xlu0 %v413
        %v441 = vpop.xlane.xlu0 %440
        %442 = vadd.xlane.f32.xlu0 %v414
        %v443 = vpop.xlane.xlu0 %442
        %444 = vadd.xlane.f32.xlu0 %v415
        %v445 = vpop.xlane.xlu0 %444
        %446 = vadd.xlane.f32.xlu0 %v416
        %v447 = vpop.xlane.xlu0 %446
        %448 = vadd.xlane.f32.xlu0 %v417
        %v449 = vpop.xlane.xlu0 %448
        %450 = vmatprep.subr.mxu0 0.0
        %451 = vmatpush1.xpose.msra.mxu0 %v401
        %452 = vmatprep.subr.mxu0 0.0
        %453 = vmatpush1.xpose.msra.mxu0 %v400
        %454 = vmatprep.subr.mxu0 0.0
        %455 = vmatpush1.xpose.msra.mxu0 %v399
        %456 = vmatprep.subr.mxu0 0.0
        %457 = vmatpush1.xpose.msra.mxu0 %v398
        %458 = vmatprep.subr.mxu0 0.0
        %459 = vmatpush1.xpose.msra.mxu0 %v397
        %460 = vmatprep.subr.mxu0 0.0
        %461 = vmatpush1.xpose.msra.mxu0 %v396
        %462 = vmatprep.subr.mxu0 0.0
        %463 = vmatpush1.xpose.msra.mxu0 %v395
        %464 = vmatprep.subr.mxu0 0.0
        %465 = vmatpush1.xpose.msra.mxu0 %v394
        %466 = vmatprep.subr.mxu0 0.0
        %467 = vmatpush1.xpose.msra.mxu0 %v393
        %468 = vmatprep.subr.mxu0 0.0
        %469 = vmatpush1.xpose.msra.mxu0 %v392
        %470 = vmatprep.subr.mxu0 0.0
        %471 = vmatpush1.xpose.msra.mxu0 %v391
        %472 = vmatprep.subr.mxu0 0.0
        %473 = vmatpush1.xpose.msra.mxu0 %v390
        %474 = vmatprep.subr.mxu0 0.0
        %475 = vmatpush1.xpose.msra.mxu0 %v389
        %476 = vmatprep.subr.mxu0 0.0
        %477 = vmatpush1.xpose.msra.mxu0 %v388
        %478 = vmatprep.subr.mxu0 0.0
        %479 = vmatpush1.xpose.msra.mxu0 %v387
        %480 = vmatprep.subr.mxu0 0.0
        %481 = vmatpush1.xpose.msra.mxu0 %v386
        %482 = vmatprep.subr.mxu0 0.0
        %483 = vmatpush2.xpose.msra.mxu0 0.0
        %484 = vmatprep.subr.mxu0 0.0
        %485 = vmatpush2.xpose.msra.mxu0 0.0
        %486 = vmatprep.subr.mxu0 0.0
        %487 = vmatpush2.xpose.msra.mxu0 0.0
        %488 = vmatprep.subr.mxu0 0.0
        %489 = vmatpush2.xpose.msra.mxu0 0.0
        %490 = vmatprep.subr.mxu0 0.0
        %491 = vmatpush2.xpose.msra.mxu0 0.0
        %492 = vmatprep.subr.mxu0 0.0
        %493 = vmatpush2.xpose.msra.mxu0 0.0
        %494 = vmatprep.subr.mxu0 0.0
        %495 = vmatpush2.xpose.msra.mxu0 0.0
        %496 = vmatprep.subr.mxu0 0.0
        %497 = vmatpush2.xpose.msra.mxu0 0.0
        %498 = vmatprep.subr.mxu0 0.0
        %499 = vmatpush2.xpose.msra.mxu0 0.0
        %500 = vmatprep.subr.mxu0 0.0
        %501 = vmatpush2.xpose.msra.mxu0 0.0
        %502 = vmatprep.subr.mxu0 0.0
        %503 = vmatpush2.xpose.msra.mxu0 0.0
        %504 = vmatprep.subr.mxu0 0.0
        %505 = vmatpush2.xpose.msra.mxu0 0.0
        %506 = vmatprep.subr.mxu0 0.0
        %507 = vmatpush2.xpose.msra.mxu0 0.0
        %508 = vmatprep.subr.mxu0 0.0
        %509 = vmatpush2.xpose.msra.mxu0 0.0
        %510 = vmatprep.subr.mxu0 0.0
        %511 = vmatpush2.xpose.msra.mxu0 0.0
        %512 = vmatprep.subr.mxu0 0.0
        %513 = vmatpush2.xpose.msra.mxu0 0.0
        %514 = vmatprep.mubr.f32.mxu0 0.0
        %515 = vmatmul.mubr.f32.gmra.mxu0 %v386
        %v516 = vpop.f32.mrf.mxu0
        %v517 = vadd.f32 0.0, %v516
        %v518 = vpop.f32.mrf.mxu0
        %519 = vmatprep.mubr.f32.mxu0 0.0
        %520 = vmatmul.mubr.f32.gmra.mxu0 %v387
        %v521 = vpop.f32.mrf.mxu0
        %v522 = vadd.f32 0.0, %v521
        %v523 = vpop.f32.mrf.mxu0
        %524 = vmatprep.mubr.f32.mxu0 0.0
        %525 = vmatmul.mubr.f32.gmra.mxu0 %v388
        %v526 = vpop.f32.mrf.mxu0
        %v527 = vadd.f32 0.0, %v526
        %v528 = vpop.f32.mrf.mxu0
        %529 = vmatprep.mubr.f32.mxu0 0.0
        %530 = vmatmul.mubr.f32.gmra.mxu0 %v389
        %v531 = vpop.f32.mrf.mxu0
        %v532 = vadd.f32 0.0, %v531
        %v533 = vpop.f32.mrf.mxu0
        %534 = vmatprep.mubr.f32.mxu0 0.0
        %535 = vmatmul.mubr.f32.gmra.mxu0 %v390
        %v536 = vpop.f32.mrf.mxu0
        %v537 = vadd.f32 0.0, %v536
        %v538 = vpop.f32.mrf.mxu0
        %539 = vmatprep.mubr.f32.mxu0 0.0
        %540 = vmatmul.mubr.f32.gmra.mxu0 %v391
        %v541 = vpop.f32.mrf.mxu0
        %v542 = vadd.f32 0.0, %v541
        %v543 = vpop.f32.mrf.mxu0
        %544 = vmatprep.mubr.f32.mxu0 0.0
        %545 = vmatmul.mubr.f32.gmra.mxu0 %v392
        %v546 = vpop.f32.mrf.mxu0
        %v547 = vadd.f32 0.0, %v546
        %v548 = vpop.f32.mrf.mxu0
        %549 = vmatprep.mubr.f32.mxu0 0.0
        %550 = vmatmul.mubr.f32.gmra.mxu0 %v393
        %v551 = vpop.f32.mrf.mxu0
        %v552 = vadd.f32 0.0, %v551
        %v553 = vpop.f32.mrf.mxu0
        %554 = vmatprep.mubr.f32.mxu0 0.0
        %555 = vmatmul.mubr.f32.gmra.mxu0 %v394
        %v556 = vpop.f32.mrf.mxu0
        %v557 = vadd.f32 0.0, %v556
        %v558 = vpop.f32.mrf.mxu0
        %559 = vmatprep.mubr.f32.mxu0 0.0
        %560 = vmatmul.mubr.f32.gmra.mxu0 %v395
        %v561 = vpop.f32.mrf.mxu0
        %v562 = vadd.f32 0.0, %v561
        %v563 = vpop.f32.mrf.mxu0
        %564 = vmatprep.mubr.f32.mxu0 0.0
        %565 = vmatmul.mubr.f32.gmra.mxu0 %v396
        %v566 = vpop.f32.mrf.mxu0
        %v567 = vadd.f32 0.0, %v566
        %v568 = vpop.f32.mrf.mxu0
        %569 = vmatprep.mubr.f32.mxu0 0.0
        %570 = vmatmul.mubr.f32.gmra.mxu0 %v397
        %v571 = vpop.f32.mrf.mxu0
        %v572 = vadd.f32 0.0, %v571
        %v573 = vpop.f32.mrf.mxu0
        %574 = vmatprep.mubr.f32.mxu0 0.0
        %575 = vmatmul.mubr.f32.gmra.mxu0 %v398
        %v576 = vpop.f32.mrf.mxu0
        %v577 = vadd.f32 0.0, %v576
        %v578 = vpop.f32.mrf.mxu0
        %579 = vmatprep.mubr.f32.mxu0 0.0
        %580 = vmatmul.mubr.f32.gmra.mxu0 %v399
        %v581 = vpop.f32.mrf.mxu0
        %v582 = vadd.f32 0.0, %v581
        %v583 = vpop.f32.mrf.mxu0
        %584 = vmatprep.mubr.f32.mxu0 0.0
        %585 = vmatmul.mubr.f32.gmra.mxu0 %v400
        %v586 = vpop.f32.mrf.mxu0
        %v587 = vadd.f32 0.0, %v586
        %v588 = vpop.f32.mrf.mxu0
        %589 = vmatprep.mubr.f32.mxu0 0.0
        %590 = vmatmul.mubr.f32.gmra.mxu0 %v401
        %v591 = vpop.f32.mrf.mxu0
        %v592 = vadd.f32 0.0, %v591
        %v593 = vpop.f32.mrf.mxu0
        %594 = vdwg.mxu0
        %vm595 = vcmask 7168
        %v597 = vsel %vm595, %v419, 0
        %v600 = vsel %vm595, %v421, 0
        %v603 = vsel %vm595, %v423, 0
        %v606 = vsel %vm595, %v425, 0
        %v609 = vsel %vm595, %v427, 0
        %v612 = vsel %vm595, %v429, 0
        %v615 = vsel %vm595, %v431, 0
        %v618 = vsel %vm595, %v433, 0
        %v621 = vsel %vm595, %v435, 0
        %v624 = vsel %vm595, %v437, 0
        %v627 = vsel %vm595, %v439, 0
        %v630 = vsel %vm595, %v441, 0
        %v633 = vsel %vm595, %v443, 0
        %v636 = vsel %vm595, %v445, 0
        %v639 = vsel %vm595, %v447, 0
        %v642 = vsel %vm595, %v449, 0
        %644 = vmatprep.subr.mxu0 0.0
        %645 = vmatpush1.xpose.msra.mxu0 %v642
        %646 = vmatprep.subr.mxu0 0.0
        %647 = vmatpush1.xpose.msra.mxu0 %v639
        %648 = vmatprep.subr.mxu0 0.0
        %649 = vmatpush1.xpose.msra.mxu0 %v636
        %650 = vmatprep.subr.mxu0 0.0
        %651 = vmatpush1.xpose.msra.mxu0 %v633
        %652 = vmatprep.subr.mxu0 0.0
        %653 = vmatpush1.xpose.msra.mxu0 %v630
        %654 = vmatprep.subr.mxu0 0.0
        %655 = vmatpush1.xpose.msra.mxu0 %v627
        %656 = vmatprep.subr.mxu0 0.0
        %657 = vmatpush1.xpose.msra.mxu0 %v624
        %658 = vmatprep.subr.mxu0 0.0
        %659 = vmatpush1.xpose.msra.mxu0 %v621
        %660 = vmatprep.subr.mxu0 0.0
        %661 = vmatpush1.xpose.msra.mxu0 %v618
        %662 = vmatprep.subr.mxu0 0.0
        %663 = vmatpush1.xpose.msra.mxu0 %v615
        %664 = vmatprep.subr.mxu0 0.0
        %665 = vmatpush1.xpose.msra.mxu0 %v612
        %666 = vmatprep.subr.mxu0 0.0
        %667 = vmatpush1.xpose.msra.mxu0 %v609
        %668 = vmatprep.subr.mxu0 0.0
        %669 = vmatpush1.xpose.msra.mxu0 %v606
        %670 = vmatprep.subr.mxu0 0.0
        %671 = vmatpush1.xpose.msra.mxu0 %v603
        %672 = vmatprep.subr.mxu0 0.0
        %673 = vmatpush1.xpose.msra.mxu0 %v600
        %674 = vmatprep.subr.mxu0 0.0
        %675 = vmatpush1.xpose.msra.mxu0 %v597
        %676 = vmatprep.subr.mxu0 0.0
        %677 = vmatpush2.xpose.msra.mxu0 0.0
        %678 = vmatprep.subr.mxu0 0.0
        %679 = vmatpush2.xpose.msra.mxu0 0.0
        %680 = vmatprep.subr.mxu0 0.0
        %681 = vmatpush2.xpose.msra.mxu0 0.0
        %682 = vmatprep.subr.mxu0 0.0
        %683 = vmatpush2.xpose.msra.mxu0 0.0
        %684 = vmatprep.subr.mxu0 0.0
        %685 = vmatpush2.xpose.msra.mxu0 0.0
        %686 = vmatprep.subr.mxu0 0.0
        %687 = vmatpush2.xpose.msra.mxu0 0.0
        %688 = vmatprep.subr.mxu0 0.0
        %689 = vmatpush2.xpose.msra.mxu0 0.0
        %690 = vmatprep.subr.mxu0 0.0
        %691 = vmatpush2.xpose.msra.mxu0 0.0
        %692 = vmatprep.subr.mxu0 0.0
        %693 = vmatpush2.xpose.msra.mxu0 0.0
        %694 = vmatprep.subr.mxu0 0.0
        %695 = vmatpush2.xpose.msra.mxu0 0.0
        %696 = vmatprep.subr.mxu0 0.0
        %697 = vmatpush2.xpose.msra.mxu0 0.0
        %698 = vmatprep.subr.mxu0 0.0
        %699 = vmatpush2.xpose.msra.mxu0 0.0
        %700 = vmatprep.subr.mxu0 0.0
        %701 = vmatpush2.xpose.msra.mxu0 0.0
        %702 = vmatprep.subr.mxu0 0.0
        %703 = vmatpush2.xpose.msra.mxu0 0.0
        %704 = vmatprep.subr.mxu0 0.0
        %705 = vmatpush2.xpose.msra.mxu0 0.0
        %706 = vmatprep.subr.mxu0 0.0
        %707 = vmatpush2.xpose.msra.mxu0 0.0
        %708 = vmatprep.mubr.f32.mxu0 0.0
        %709 = vmatmul.mubr.f32.gmra.mxu0 %v597
        %v710 = vpop.f32.mrf.mxu0
        %v711 = vadd.f32 0.0, %v710
        %v712 = vpop.f32.mrf.mxu0
        %713 = vmatprep.mubr.f32.mxu0 0.0
        %714 = vmatmul.mubr.f32.gmra.mxu0 %v600
        %v715 = vpop.f32.mrf.mxu0
        %v716 = vadd.f32 0.0, %v715
        %v717 = vpop.f32.mrf.mxu0
        %718 = vmatprep.mubr.f32.mxu0 0.0
        %719 = vmatmul.mubr.f32.gmra.mxu0 %v603
        %v720 = vpop.f32.mrf.mxu0
        %v721 = vadd.f32 0.0, %v720
        %v722 = vpop.f32.mrf.mxu0
        %723 = vmatprep.mubr.f32.mxu0 0.0
        %724 = vmatmul.mubr.f32.gmra.mxu0 %v606
        %v725 = vpop.f32.mrf.mxu0
        %v726 = vadd.f32 0.0, %v725
        %v727 = vpop.f32.mrf.mxu0
        %728 = vmatprep.mubr.f32.mxu0 0.0
        %729 = vmatmul.mubr.f32.gmra.mxu0 %v609
        %v730 = vpop.f32.mrf.mxu0
        %v731 = vadd.f32 0.0, %v730
        %v732 = vpop.f32.mrf.mxu0
        %733 = vmatprep.mubr.f32.mxu0 0.0
        %734 = vmatmul.mubr.f32.gmra.mxu0 %v612
        %v735 = vpop.f32.mrf.mxu0
        %v736 = vadd.f32 0.0, %v735
        %v737 = vpop.f32.mrf.mxu0
        %738 = vmatprep.mubr.f32.mxu0 0.0
        %739 = vmatmul.mubr.f32.gmra.mxu0 %v615
        %v740 = vpop.f32.mrf.mxu0
        %v741 = vadd.f32 0.0, %v740
        %v742 = vpop.f32.mrf.mxu0
        %743 = vmatprep.mubr.f32.mxu0 0.0
        %744 = vmatmul.mubr.f32.gmra.mxu0 %v618
        %v745 = vpop.f32.mrf.mxu0
        %v746 = vadd.f32 0.0, %v745
        %v747 = vpop.f32.mrf.mxu0
        %748 = vmatprep.mubr.f32.mxu0 0.0
        %749 = vmatmul.mubr.f32.gmra.mxu0 %v621
        %v750 = vpop.f32.mrf.mxu0
        %v751 = vadd.f32 0.0, %v750
        %v752 = vpop.f32.mrf.mxu0
        %753 = vmatprep.mubr.f32.mxu0 0.0
        %754 = vmatmul.mubr.f32.gmra.mxu0 %v624
        %v755 = vpop.f32.mrf.mxu0
        %v756 = vadd.f32 0.0, %v755
        %v757 = vpop.f32.mrf.mxu0
        %758 = vmatprep.mubr.f32.mxu0 0.0
        %759 = vmatmul.mubr.f32.gmra.mxu0 %v627
        %v760 = vpop.f32.mrf.mxu0
        %v761 = vadd.f32 0.0, %v760
        %v762 = vpop.f32.mrf.mxu0
        %763 = vmatprep.mubr.f32.mxu0 0.0
        %764 = vmatmul.mubr.f32.gmra.mxu0 %v630
        %v765 = vpop.f32.mrf.mxu0
        %v766 = vadd.f32 0.0, %v765
        %v767 = vpop.f32.mrf.mxu0
        %768 = vmatprep.mubr.f32.mxu0 0.0
        %769 = vmatmul.mubr.f32.gmra.mxu0 %v633
        %v770 = vpop.f32.mrf.mxu0
        %v771 = vadd.f32 0.0, %v770
        %v772 = vpop.f32.mrf.mxu0
        %773 = vmatprep.mubr.f32.mxu0 0.0
        %774 = vmatmul.mubr.f32.gmra.mxu0 %v636
        %v775 = vpop.f32.mrf.mxu0
        %v776 = vadd.f32 0.0, %v775
        %v777 = vpop.f32.mrf.mxu0
        %778 = vmatprep.mubr.f32.mxu0 0.0
        %779 = vmatmul.mubr.f32.gmra.mxu0 %v639
        %v780 = vpop.f32.mrf.mxu0
        %v781 = vadd.f32 0.0, %v780
        %v782 = vpop.f32.mrf.mxu0
        %783 = vmatprep.mubr.f32.mxu0 0.0
        %784 = vmatmul.mubr.f32.gmra.mxu0 %v642
        %v785 = vpop.f32.mrf.mxu0
        %v786 = vadd.f32 0.0, %v785
        %v787 = vpop.f32.mrf.mxu0
        %788 = vdwg.mxu0
        %v789 = vmax.f32 %v711, 1e-06
        %v790 = vmax.f32 %v716, 1e-06
        %v791 = vmax.f32 %v721, 1e-06
        %v792 = vmax.f32 %v726, 1e-06
        %v793 = vmax.f32 %v731, 1e-06
        %v794 = vmax.f32 %v736, 1e-06
        %v795 = vmax.f32 %v741, 1e-06
        %v796 = vmax.f32 %v746, 1e-06
        %v797 = vmax.f32 %v751, 1e-06
        %v798 = vmax.f32 %v756, 1e-06
        %v799 = vmax.f32 %v761, 1e-06
        %v800 = vmax.f32 %v766, 1e-06
        %v801 = vmax.f32 %v771, 1e-06
        %v802 = vmax.f32 %v776, 1e-06
        %v803 = vmax.f32 %v781, 1e-06
        %v804 = vmax.f32 %v786, 1e-06
        %v805 = vand.u32 2147483647, %v517
        %v806 = vand.u32 2147483647, %v522
        %v807 = vand.u32 2147483647, %v527
        %v808 = vand.u32 2147483647, %v532
        %v809 = vand.u32 2147483647, %v537
        %v810 = vand.u32 2147483647, %v542
        %v811 = vand.u32 2147483647, %v547
        %v812 = vand.u32 2147483647, %v552
        %v813 = vand.u32 2147483647, %v557
        %v814 = vand.u32 2147483647, %v562
        %v815 = vand.u32 2147483647, %v567
        %v816 = vand.u32 2147483647, %v572
        %v817 = vand.u32 2147483647, %v577
        %v818 = vand.u32 2147483647, %v582
        %v819 = vand.u32 2147483647, %v587
        %v820 = vand.u32 2147483647, %v592
        %v821 = vrsqrt.pop %v789
        %v822 = vrsqrt.pop %v790
        %v823 = vrsqrt.pop %v791
        %v824 = vrsqrt.pop %v792
        %v825 = vrsqrt.pop %v793
        %v826 = vrsqrt.pop %v794
        %v827 = vrsqrt.pop %v795
        %v828 = vrsqrt.pop %v796
        %v829 = vrsqrt.pop %v797
        %v830 = vrsqrt.pop %v798
        %v831 = vrsqrt.pop %v799
        %v832 = vrsqrt.pop %v800
        %v833 = vrsqrt.pop %v801
        %v834 = vrsqrt.pop %v802
        %v835 = vrsqrt.pop %v803
        %v836 = vrsqrt.pop %v804
        %v837 = vmul.f32 %v805, %v821
        %v838 = vmul.f32 %v806, %v822
        %v839 = vmul.f32 %v807, %v823
        %v840 = vmul.f32 %v808, %v824
        %v841 = vmul.f32 %v809, %v825
        %v842 = vmul.f32 %v810, %v826
        %v843 = vmul.f32 %v811, %v827
        %v844 = vmul.f32 %v812, %v828
        %v845 = vmul.f32 %v813, %v829
        %v846 = vmul.f32 %v814, %v830
        %v847 = vmul.f32 %v815, %v831
        %v848 = vmul.f32 %v816, %v832
        %v849 = vmul.f32 %v817, %v833
        %v850 = vmul.f32 %v818, %v834
        %v851 = vmul.f32 %v819, %v835
        %v852 = vmul.f32 %v820, %v836
        %vm853 = vcmp.gt.f32.partialorder %v837, 0.1
        %vm854 = vcmp.gt.f32.partialorder %v838, 0.1
        %vm855 = vcmp.gt.f32.partialorder %v839, 0.1
        %vm856 = vcmp.gt.f32.partialorder %v840, 0.1
        %vm857 = vcmp.gt.f32.partialorder %v841, 0.1
        %vm858 = vcmp.gt.f32.partialorder %v842, 0.1
        %vm859 = vcmp.gt.f32.partialorder %v843, 0.1
        %vm860 = vcmp.gt.f32.partialorder %v844, 0.1
        %vm861 = vcmp.gt.f32.partialorder %v845, 0.1
        %vm862 = vcmp.gt.f32.partialorder %v846, 0.1
        %vm863 = vcmp.gt.f32.partialorder %v847, 0.1
        %vm864 = vcmp.gt.f32.partialorder %v848, 0.1
        %vm865 = vcmp.gt.f32.partialorder %v849, 0.1
        %vm866 = vcmp.gt.f32.partialorder %v850, 0.1
        %vm867 = vcmp.gt.f32.partialorder %v851, 0.1
        %vm868 = vcmp.gt.f32.partialorder %v852, 0.1
        %v869 = vsel %vm853, %v837, 0.0
        %v870 = vsel %vm854, %v838, 0.0
        %v871 = vsel %vm855, %v839, 0.0
        %v872 = vsel %vm856, %v840, 0.0
        %v873 = vsel %vm857, %v841, 0.0
        %v874 = vsel %vm858, %v842, 0.0
        %v875 = vsel %vm859, %v843, 0.0
        %v876 = vsel %vm860, %v844, 0.0
        %v877 = vsel %vm861, %v845, 0.0
        %v878 = vsel %vm862, %v846, 0.0
        %v879 = vsel %vm863, %v847, 0.0
        %v880 = vsel %vm864, %v848, 0.0
        %v881 = vsel %vm865, %v849, 0.0
        %v882 = vsel %vm866, %v850, 0.0
        %v883 = vsel %vm867, %v851, 0.0
        %v884 = vsel %vm868, %v852, 0.0
        %885 = vst [vmem:[%s176] sm:$0xff] %v869
        %886 = vst [vmem:[%s176 + $0x8] sm:$0xff] %v870
        %887 = vst [vmem:[%s176 + $0x10] sm:$0xff] %v871
        %888 = vst [vmem:[%s176 + $0x18] sm:$0xff] %v872
        %889 = vst [vmem:[%s176 + $0x20] sm:$0xff] %v873
        %890 = vst [vmem:[%s176 + $0x28] sm:$0xff] %v874
        %891 = vst [vmem:[%s176 + $0x30] sm:$0xff] %v875
        %892 = vst [vmem:[%s176 + $0x38] sm:$0xff] %v876
        %893 = vst [vmem:[%s176 + $0x40] sm:$0xff] %v877
        %894 = vst [vmem:[%s176 + $0x48] sm:$0xff] %v878
        %895 = vst [vmem:[%s176 + $0x50] sm:$0xff] %v879
        %896 = vst [vmem:[%s176 + $0x58] sm:$0xff] %v880
        %897 = vst [vmem:[%s176 + $0x60] sm:$0xff] %v881
        %898 = vst [vmem:[%s176 + $0x68] sm:$0xff] %v882
        %899 = vst [vmem:[%s176 + $0x70] sm:$0xff] %v883
        %900 = vst [vmem:[%s176 + $0x78] sm:$0xff] %v884
        %s901 = sand.u32 %s75, 1
        %s902 = scalar_lea.sflag [#allocation4], %s901
        %s903 = sand.u32 %s75, 1
        %s904 = smul.addr %s903, 128
        %s905 = scalar_lea.vmem [#allocation7], %s904
        // Predicated region
        $region37: #{tpu_custom_call.1} parent=27 // pred_check
          %p906 = pneg %p85
        $region38: #{tpu_custom_call.1} parent=27 // pred_check_branch
          %908 = sbr.rel (%p906) target = $region40
        $region39: #{tpu_custom_call.1} parent=27 // pred_region
          %s910 = ssub.s32 2048, 2048
          %911 = vsyncadd %s902, %s910
          %s912 = smul.addr %s20, 16
          %s913 = smul.addr %s912, 128
          %s914 = scalar_lea.hbm %s2, %s913
          %s915 = sshll.u32 %s905, 4
          %s916 = int_to_ptr.vmem [resolvable:$true] %s915
          %921 = dma.vmem_to_hbm [thread:$0]  %s916, 2048, %s914, %s902, 128, 128, 8
        $region40: #{tpu_custom_call.1} parent=27 // pred_fallthru
          _
      $region28: #{tpu_custom_call.1} parent=5 // pred_fallthru
        _
      %p922 = scmp.le.s32.totalorder 2, %s15
      // Predicated region
      $region41: #{tpu_custom_call.1} parent=5 // pred_check
        %p923 = pneg %p922
      $region42: #{tpu_custom_call.1} parent=5 // pred_check_branch
        %925 = sbr.rel (%p923) target = $region44
      $region43: #{tpu_custom_call.1} parent=5 // pred_region
        %s926 = ssub.s32 %s15, 2
        // Predicated region
        $region45: #{tpu_custom_call.1} parent=43 // pred_check
          %p927 = pneg %p91
        $region46: #{tpu_custom_call.1} parent=43 // pred_check_branch
          %929 = sbr.rel (%p927) target = $region48
        $region47: #{tpu_custom_call.1} parent=43 // pred_region
          %s930 = sand.u32 %s76, 1
          %s931 = scalar_lea.sflag [#allocation4], %s930
          %s932 = sand.u32 %s76, 1
          %s933 = smul.addr %s932, 128
          %s934 = scalar_lea.vmem [#allocation7], %s933
          %935 = dma.done %s931, 2048
        $region48: #{tpu_custom_call.1} parent=43 // pred_fallthru
          _
      $region44: #{tpu_custom_call.1} parent=5 // pred_fallthru
        _
    $region6: #{tpu_custom_call.1} parent=1 // loop_footer
      %s19 = sadd.s32 1, %s15
    $region7: #{tpu_custom_call.1} parent=1 // loop_footer_branch
      %14 = sbr.rel target = $region3
    $region8: #{tpu_custom_call.1} parent=1 // loop_exit
      _
    %936 = vsyncpa [#allocation3], 1
    %s937 = scalar_lea.sflag [#allocation3], 1
    %938 = vsyncpa %s937, 1
    %939 = vsyncpa [#allocation6], 1
    %940 = vsyncpa [#allocation4], 1
    %s941 = scalar_lea.sflag [#allocation4], 1
    %942 = vsyncpa %s941, 1

</llo_original>
